<compile_context>
chip_gen: v7x
topology: tpu7x:2x2x1
jax: 0.10.0
libtpu: 0.0.40
codegen_flags: <defaults>
</compile_context>

<pallas_src>
import functools

import jax
import jax.numpy as jnp
from jax import lax
from jax.experimental import pallas as pl
from jax.experimental.pallas import tpu as pltpu

LANES = 128
SUBLANES = 8
TM_MAX = 2048  # rows per streaming block (1 MiB per f32 input block; sweep 2048-4096)


def _quantile_partial_sums_kernel(preds_ref, target_ref, se_ref, smin_ref, *,
                                  tm, bps, rows, needs_mask):
    i = pl.program_id(0)   # split axis ("parallel": both TensorCores on dual-TC chips)
    j = pl.program_id(1)   # reduction over row blocks within a split ("arbitrary")

    @pl.when(j == 0)
    def _init():
        se_ref[...] = jnp.zeros_like(se_ref)
        smin_ref[...] = jnp.zeros_like(smin_ref)

    # Errors in f32 (in-kernel cast is a free VPU op for an HBM-bound kernel).
    e = target_ref[...].astype(jnp.float32) - preds_ref[...].astype(jnp.float32)

    def accumulate(err):
        # Fold (tm, 128) -> (8, 128): pure vreg-wise VPU adds (no cross-lane work).
        folded = err.reshape(tm // SUBLANES, SUBLANES, LANES)
        se_ref[...] += jnp.sum(folded, axis=0)
        smin_ref[...] += jnp.sum(jnp.minimum(folded, 0.0), axis=0)

    if not needs_mask:
        # Every block is fully in-bounds: mask code is not even compiled.
        accumulate(e)
    else:
        blk = i * bps + j                      # logical (unclamped) block index
        is_interior = (blk + 1) * tm <= rows   # fully in-bounds block?

        @pl.when(is_interior)
        def _full_block():                     # hot path: no mask work at all
            accumulate(e)

        @pl.when(jnp.logical_not(is_interior))
        def _ragged_or_duplicate_block():
            # Valid rows in this block: [0, rows - blk*tm). For clamped duplicate
            # blocks (blk >= total_blocks) the threshold is <= 0 -> all zeroed.
            thresh = rows - blk * tm
            valid = lax.broadcasted_iota(jnp.int32, (tm, LANES), 0) < thresh
            accumulate(jnp.where(valid, e, 0.0))


def _tensorcores_per_chip():
    """Best-effort trace-time TensorCore-per-chip count (2 on dual-TC chips).

    Falls back to 2: correctness is mask-protected either way, and on 1-TC
    chips the worst case is one duplicated (masked) row-block DMA.
    """
    try:
        info = pltpu.get_tpu_info()
    except Exception:
        return 2
    for name in ("num_cores", "num_tensorcores", "tensor_cores_per_chip",
                 "cores_per_chip", "core_count"):
        try:
            val = int(getattr(info, name))
        except (AttributeError, TypeError, ValueError):
            continue
        if 1 <= val <= 2:
            return val
    return 2


def quantile_loss(preds, target, quantile):
    """Pallas TPU equivalent of QuantileLoss(quantile)(preds, target)."""
    assert preds.shape == target.shape
    n = preds.size
    assert n > 0

    p = preds.reshape(-1)
    t = target.reshape(-1)
    itemsize = p.dtype.itemsize
    # Sublane packing multiple: f32 -> 8, bf16/fp16 -> 16, int8/fp8 -> 32.
    sub_mult = {4: SUBLANES, 2: 2 * SUBLANES, 1: 4 * SUBLANES}.get(itemsize, SUBLANES)

    if n <= TM_MAX * LANES:
        # Small path: single fully in-bounds block. The tiny zero pad is exact
        # (e == 0 contributes 0 to both partial sums) and negligible in traffic.
        block_elems = sub_mult * LANES
        padded = -(-n // block_elems) * block_elems
        if padded != n:
            p = jnp.pad(p, (0, padded - n))
            t = jnp.pad(t, (0, padded - n))
        rows = padded // LANES
        tm = rows
    else:
        # Streaming path: zero wrapper-side copies when n % 128 == 0 (the common
        # case); otherwise pad by < 128 elements to reach a lane multiple.
        # TODO(synk): for huge non-multiple-of-128 inputs this jnp.pad is an extra
        # HBM pass; removing it needs verified allow_input_fusion or a manual-DMA
        # tail handler, both riskier than they are worth here.
        padded = -(-n // LANES) * LANES
        if padded != n:
            p = jnp.pad(p, (0, padded - n))
            t = jnp.pad(t, (0, padded - n))
        rows = padded // LANES
        tm = TM_MAX

    p = p.reshape(rows, LANES)
    t = t.reshape(rows, LANES)

    total_blocks = -(-rows // tm)
    nsplit = max(1, min(_tensorcores_per_chip(), 2, total_blocks))
    bps = -(-total_blocks // nsplit)           # row blocks per split
    grid = (nsplit, bps)

    # Mask code is only compiled in when some block can see OOB/duplicated rows.
    needs_mask = (rows % tm != 0) or (nsplit * bps != total_blocks)

    def data_map(i, j):
        # Clamp so we never request a block fully outside the array; clamped
        # (duplicated) blocks are zeroed by the in-kernel row mask.
        return (jnp.minimum(i * bps + j, total_blocks - 1), 0)

    kernel = functools.partial(_quantile_partial_sums_kernel,
                               tm=tm, bps=bps, rows=rows, needs_mask=needs_mask)

    out_bytes = 2 * nsplit * SUBLANES * LANES * 4
    cost = pl.CostEstimate(
        flops=4 * rows * LANES,                 # sub + min + 2 fold-adds per element
        transcendentals=0,
        bytes_accessed=2 * rows * LANES * itemsize + out_bytes)

    sum_e, sum_min = pl.pallas_call(
        kernel,
        out_shape=(jax.ShapeDtypeStruct((nsplit * SUBLANES, LANES), jnp.float32),
                   jax.ShapeDtypeStruct((nsplit * SUBLANES, LANES), jnp.float32)),
        grid_spec=pltpu.PrefetchScalarGridSpec(
            num_scalar_prefetch=0,
            grid=grid,
            in_specs=[
                pl.BlockSpec((tm, LANES), data_map),                    # preds
                pl.BlockSpec((tm, LANES), data_map),                    # target
            ],
            # Output block index is constant across j -> VMEM-resident accumulator.
            out_specs=[pl.BlockSpec((SUBLANES, LANES), lambda i, j: (i, 0)),
                       pl.BlockSpec((SUBLANES, LANES), lambda i, j: (i, 0))],
        ),
        compiler_params=pltpu.CompilerParams(
            # TODO(synk): on v7x the leading axis may need pltpu.CORE_PARALLEL to
            # guarantee both TensorCores are used; "parallel" is kept here for
            # portability (CORE_PARALLEL can reject grids on single-TC chips).
            dimension_semantics=("parallel", "arbitrary"),
            vmem_limit_bytes=32 * 1024 * 1024,
        ),
        cost_estimate=cost,
    )(p, t)

    # Glue on tiny (nsplit*8, 128) partials:
    #   max((q-1)e, qe) = q*e - min(e, 0)  =>  sum(loss) = q*S_e - S_min
    q = jnp.asarray(quantile, dtype=jnp.float32)
    s_e = jnp.sum(sum_e)
    s_min = jnp.sum(sum_min)
    return ((q * s_e - s_min) / jnp.float32(n)).astype(jnp.float32)


if __name__ == "__main__":
    key = jax.random.PRNGKey(0)

    def reference(preds, target, q):
        errors = target - preds
        return jnp.mean(jnp.maximum((q - 1.0) * errors, q * errors))

    # 1) Small NCHW preds/target pair (single-block fast path).
    k1, k2 = jax.random.split(key)
    shape = (2, 4, 16, 16)
    preds = jax.random.normal(k1, shape, dtype=jnp.float32)
    target = jax.random.normal(k2, shape, dtype=jnp.float32)
    out = jax.block_until_ready(quantile_loss(preds, target, 0.9))
    ref = reference(preds, target, 0.9)
    assert jnp.allclose(out, ref, rtol=1e-5, atol=1e-5), (out, ref)

    # 2) Streaming path: 2 row blocks, split across TCs, ragged (masked) final block.
    k3, k4 = jax.random.split(k2)
    shape2 = (8, 8, 72, 72)          # 331776 elems -> 2592 rows -> 2 blocks of 2048
    p2 = jax.random.normal(k3, shape2, dtype=jnp.float32)
    t2 = jax.random.normal(k4, shape2, dtype=jnp.float32)
    out2 = jax.block_until_ready(quantile_loss(p2, t2, 0.5))
    ref2 = reference(p2, t2, 0.5)
    assert jnp.allclose(out2, ref2, rtol=1e-5, atol=1e-5), (out2, ref2)

    # 3) Tiny non-multiple-of-128 element count (small-path zero pad).
    k5, k6 = jax.random.split(k4)
    shape3 = (3, 5, 7, 11)           # 1155 elements
    p3 = jax.random.normal(k5, shape3, dtype=jnp.float32)
    t3 = jax.random.normal(k6, shape3, dtype=jnp.float32)
    out3 = jax.block_until_ready(quantile_loss(p3, t3, 0.1))
    ref3 = reference(p3, t3, 0.1)
    assert jnp.allclose(out3, ref3, rtol=1e-5, atol=1e-5), (out3, ref3)

    # 4) Larger ragged streaming case: 5 row blocks (odd -> possible clamped
    #    duplicate block, masked to zero), plus a <128-element lane pad.
    k7, k8 = jax.random.split(k6)
    shape4 = (5, 8, 181, 181)        # 1,310,440 elems -> 10238 rows -> 5 blocks
    p4 = jax.random.normal(k7, shape4, dtype=jnp.float32)
    t4 = jax.random.normal(k8, shape4, dtype=jnp.float32)
    out4 = jax.block_until_ready(quantile_loss(p4, t4, 0.75))
    ref4 = reference(p4, t4, 0.75)
    assert jnp.allclose(out4, ref4, rtol=1e-5, atol=1e-5), (out4, ref4)

    print("KERNEL_OK")
</pallas_src>

<mosaic_0001>
module attributes {stable_mosaic.version = 11 : i64} {
  func.func @_quantile_partial_sums_kernel(%arg0: i32, %arg1: i32, %arg2: memref<16x128xf32, #tpu.memory_space<vmem>>, %arg3: memref<16x128xf32, #tpu.memory_space<vmem>>, %arg4: memref<8x128xf32, #tpu.memory_space<vmem>>, %arg5: memref<8x128xf32, #tpu.memory_space<vmem>>) attributes {dimension_semantics = [#tpu.dimension_semantics<parallel>, #tpu.dimension_semantics<arbitrary>], iteration_bounds = array<i64: 1, 1>, scalar_prefetch = 0 : i64, scratch_operands = 0 : i64, tpu.core_type = #tpu.core_type<tc>, window_params = [{transform_indices = @transform_0, window_bounds = array<i64: 16, 128>}, {transform_indices = @transform_1, window_bounds = array<i64: 16, 128>}, {transform_indices = @transform_2, window_bounds = array<i64: 8, 128>}, {transform_indices = @transform_3, window_bounds = array<i64: 8, 128>}]} {
    %c0_i32 = arith.constant 0 : i32
    %0 = arith.cmpi eq, %arg1, %c0_i32 : i32
    %1 = arith.extui %0 : i1 to i32
    %c0_i32_0 = arith.constant 0 : i32
    %2 = arith.cmpi ne, %1, %c0_i32_0 : i32
    scf.if %2 {
      %cst_14 = arith.constant 0.000000e+00 : f32
      %17 = vector.broadcast %cst_14 : f32 to vector<8x128xf32>
      %c0_15 = arith.constant 0 : index
      %c0_16 = arith.constant 0 : index
      %18 = vector.load %arg4[%c0_15, %c0_16] : memref<8x128xf32, #tpu.memory_space<vmem>>, vector<8x128xf32>
      tpu.vector_store %arg4[%c0_15, %c0_16], %17 {strides = array<i32>} : memref<8x128xf32, #tpu.memory_space<vmem>>, vector<8x128xf32>,
      %cst_17 = arith.constant 0.000000e+00 : f32
      %19 = vector.broadcast %cst_17 : f32 to vector<8x128xf32>
      %c0_18 = arith.constant 0 : index
      %c0_19 = arith.constant 0 : index
      %20 = vector.load %arg5[%c0_18, %c0_19] : memref<8x128xf32, #tpu.memory_space<vmem>>, vector<8x128xf32>
      tpu.vector_store %arg5[%c0_18, %c0_19], %19 {strides = array<i32>} : memref<8x128xf32, #tpu.memory_space<vmem>>, vector<8x128xf32>,
    } else {
    }
    %c0 = arith.constant 0 : index
    %c0_1 = arith.constant 0 : index
    %3 = vector.load %arg3[%c0, %c0_1] : memref<16x128xf32, #tpu.memory_space<vmem>>, vector<16x128xf32>
    %c0_2 = arith.constant 0 : index
    %c0_3 = arith.constant 0 : index
    %4 = vector.load %arg2[%c0_2, %c0_3] : memref<16x128xf32, #tpu.memory_space<vmem>>, vector<16x128xf32>
    %5 = arith.subf %3, %4 : vector<16x128xf32>
    %6 = vector.shape_cast %5 : vector<16x128xf32> to vector<2x8x128xf32>
    %c0_4 = arith.constant 0 : index
    %c0_5 = arith.constant 0 : index
    %7 = vector.load %arg4[%c0_4, %c0_5] : memref<8x128xf32, #tpu.memory_space<vmem>>, vector<8x128xf32>
    %cst = arith.constant dense<0.000000e+00> : vector<8x128xf32>
    %8 = vector.multi_reduction <add>, %6, %cst [0] : vector<2x8x128xf32> to vector<8x128xf32>
    %9 = arith.addf %7, %8 : vector<8x128xf32>
    %c0_6 = arith.constant 0 : index
    %c0_7 = arith.constant 0 : index
    %10 = vector.load %arg4[%c0_6, %c0_7] : memref<8x128xf32, #tpu.memory_space<vmem>>, vector<8x128xf32>
    tpu.vector_store %arg4[%c0_6, %c0_7], %9 {strides = array<i32>} : memref<8x128xf32, #tpu.memory_space<vmem>>, vector<8x128xf32>,
    %c0_8 = arith.constant 0 : index
    %c0_9 = arith.constant 0 : index
    %11 = vector.load %arg5[%c0_8, %c0_9] : memref<8x128xf32, #tpu.memory_space<vmem>>, vector<8x128xf32>
    %cst_10 = arith.constant 0.000000e+00 : f32
    %12 = vector.broadcast %cst_10 : f32 to vector<2x8x128xf32>
    %13 = arith.minimumf %6, %12 : vector<2x8x128xf32>
    %cst_11 = arith.constant dense<0.000000e+00> : vector<8x128xf32>
    %14 = vector.multi_reduction <add>, %13, %cst_11 [0] : vector<2x8x128xf32> to vector<8x128xf32>
    %15 = arith.addf %11, %14 : vector<8x128xf32>
    %c0_12 = arith.constant 0 : index
    %c0_13 = arith.constant 0 : index
    %16 = vector.load %arg5[%c0_12, %c0_13] : memref<8x128xf32, #tpu.memory_space<vmem>>, vector<8x128xf32>
    tpu.vector_store %arg5[%c0_12, %c0_13], %15 {strides = array<i32>} : memref<8x128xf32, #tpu.memory_space<vmem>>, vector<8x128xf32>,
    return
  }
  func.func @transform_0(%arg0: i32, %arg1: i32) -> (i32, i32) {
    %c1_i32 = arith.constant 1 : i32
    %0 = arith.muli %arg0, %c1_i32 : i32
    %1 = arith.addi %0, %arg1 : i32
    %c0_i32 = arith.constant 0 : i32
    %2 = arith.minsi %1, %c0_i32 : i32
    %c0_i32_0 = arith.constant 0 : i32
    %c0_i32_1 = arith.constant 0 : i32
    return %2, %c0_i32_0 : i32, i32
  }
  func.func @transform_1(%arg0: i32, %arg1: i32) -> (i32, i32) {
    %c1_i32 = arith.constant 1 : i32
    %0 = arith.muli %arg0, %c1_i32 : i32
    %1 = arith.addi %0, %arg1 : i32
    %c0_i32 = arith.constant 0 : i32
    %2 = arith.minsi %1, %c0_i32 : i32
    %c0_i32_0 = arith.constant 0 : i32
    %c0_i32_1 = arith.constant 0 : i32
    return %2, %c0_i32_0 : i32, i32
  }
  func.func @transform_2(%arg0: i32, %arg1: i32) -> (i32, i32) {
    %c0_i32 = arith.constant 0 : i32
    %c0_i32_0 = arith.constant 0 : i32
    return %arg0, %c0_i32 : i32, i32
  }
  func.func @transform_3(%arg0: i32, %arg1: i32) -> (i32, i32) {
    %c0_i32 = arith.constant 0 : i32
    %c0_i32_0 = arith.constant 0 : i32
    return %arg0, %c0_i32 : i32, i32
  }
}

</mosaic_0001>

<llo_original>
// kernel: tpu_custom_call.1
$region0: #{tpu_custom_call.1}
  #allocation0 [shape = 'u32[]', space=smem, size = 0x4, offset = 0x4, fixed_abs, tag = 'smem constant byte address 0x4 - core index']
  #allocation1 [shape = 'u32[144,128]{1,0:T(1,128)}', space=vmem, size = 0x12000, scoped, tag = 'internal scratch']
  %s0 = inlined_call_operand.hbm [shape: f32[16,128], index: 0, kind: input, shape index: {}]
  %s1 = inlined_call_operand.hbm [shape: f32[16,128], index: 1, kind: input, shape index: {}]
  %s2 = inlined_call_operand.hbm [shape: f32[8,128], index: 2, kind: output, shape index: {0}]
  %s3 = inlined_call_operand.hbm [shape: f32[8,128], index: 3, kind: output, shape index: {1}]
  %4 = xla_tuple %s2, %s3
  %s5 = sld [smem:[#allocation0]]
  $region38: #{tpu_custom_call.1} parent=0
    _
  %s7 = ssub.s32 1, %s5
  %s8 = scalar_select 0, %s7, %s5
  $region1: #{tpu_custom_call.1} parent=0
    #allocation2 [shape = 'u8[8192]{0}', space=vmem, size = 0x2000, scoped, tag = 'input window, operand 0, single buffered']
    #allocation3 [shape = 's32[1]{0}', space=sflag, size = 0x4, scoped, tag = 'scoped memory for tpu_custom_call.1']
    #allocation4 [shape = 's32[1]{0}', space=sflag, size = 0x4, scoped, tag = 'scoped memory for tpu_custom_call.1']
    #allocation5 [shape = 'u8[8192]{0}', space=vmem, size = 0x2000, scoped, tag = 'input window, operand 1, single buffered']
    #allocation6 [shape = 's32[1]{0}', space=sflag, size = 0x4, scoped, tag = 'scoped memory for tpu_custom_call.1']
    #allocation7 [shape = 'u8[4096]{0}', space=vmem, size = 0x1000, scoped, tag = 'output window, operand 0, single buffered']
    #allocation8 [shape = 'u8[4096]{0}', space=vmem, size = 0x1000, scoped, tag = 'output window, operand 1, single buffered']
    #allocation9 [shape = 's32[1]{0}', space=sflag, size = 0x4, scoped, tag = 'scoped memory for tpu_custom_call.1']
    %9 = vsyncpa [#allocation3], 0
    %10 = vsyncpa [#allocation6], 0
    %11 = vsyncpa [#allocation4], 0
    %12 = vsyncpa [#allocation9], 0
    // Predicated region
    $region2: #{tpu_custom_call.1} parent=1 // pred_check
      _
    $region3: #{tpu_custom_call.1} parent=1 // pred_check_branch
      %14 = sbr.rel (0) target = $region5
    $region4: #{tpu_custom_call.1} parent=1 // pred_region
      %s15 = sadd.s32 0, 0
      %p16 = scmp.lt.s32.totalorder %s15, 0
      %s17 = scalar_select %p16, %s15, 0
      %s18 = smul.u32 2, %s17
      %s20 = ssub.s32 256, 256
      %21 = vsyncadd [#allocation3], %s20
      %s22 = smul.addr %s18, 128
      %s23 = scalar_lea.hbm %s0, %s22
      %s24 = sshll.u32 [#allocation2], 4
      %s25 = int_to_ptr.vmem [resolvable:$true] %s24
      %30 = dma.hbm_to_vmem [thread:$0]  %s23, 256, %s25, [#allocation3], 128, 128, 8
    $region5: #{tpu_custom_call.1} parent=1 // pred_fallthru
      _
    // Predicated region
    $region6: #{tpu_custom_call.1} parent=1 // pred_check
      _
    $region7: #{tpu_custom_call.1} parent=1 // pred_check_branch
      %32 = sbr.rel (0) target = $region9
    $region8: #{tpu_custom_call.1} parent=1 // pred_region
      %s33 = sadd.s32 0, 0
      %p34 = scmp.lt.s32.totalorder %s33, 0
      %s35 = scalar_select %p34, %s33, 0
      %s36 = smul.u32 2, %s35
      %s38 = ssub.s32 256, 256
      %39 = vsyncadd [#allocation6], %s38
      %s40 = smul.addr %s36, 128
      %s41 = scalar_lea.hbm %s1, %s40
      %s42 = sshll.u32 [#allocation5], 4
      %s43 = int_to_ptr.vmem [resolvable:$true] %s42
      %48 = dma.hbm_to_vmem [thread:$0]  %s41, 256, %s43, [#allocation6], 128, 128, 8
    $region9: #{tpu_custom_call.1} parent=1 // pred_fallthru
      _
    // Predicated region
    $region10: #{tpu_custom_call.1} parent=1 // pred_check
      _
    $region11: #{tpu_custom_call.1} parent=1 // pred_check_branch
      %50 = sbr.rel (0) target = $region13
    $region12: #{tpu_custom_call.1} parent=1 // pred_region
      %51 = dma.done [#allocation3], 256
    $region13: #{tpu_custom_call.1} parent=1 // pred_fallthru
      _
    // Predicated region
    $region14: #{tpu_custom_call.1} parent=1 // pred_check
      _
    $region15: #{tpu_custom_call.1} parent=1 // pred_check_branch
      %53 = sbr.rel (0) target = $region17
    $region16: #{tpu_custom_call.1} parent=1 // pred_region
      %54 = dma.done [#allocation6], 256
    $region17: #{tpu_custom_call.1} parent=1 // pred_fallthru
      _
    %s55 = sadd.s32 0, 0
    %p56 = scmp.lt.s32.totalorder %s55, 0
    %s57 = scalar_select %p56, %s55, 0
    %s58 = smul.u32 2, %s57
    %s59 = sadd.s32 0, 0
    %p60 = scmp.lt.s32.totalorder %s59, 0
    %s61 = scalar_select %p60, %s59, 0
    %s62 = smul.u32 2, %s61
    %p63 = scmp.eq.s32.totalorder 0, 0
    // Predicated region
    $region18: #{tpu_custom_call.1} parent=1 // pred_check
      %p64 = pneg %p63
    $region19: #{tpu_custom_call.1} parent=1 // pred_check_branch
      %66 = sbr.rel (%p64) target = $region21
    $region20: #{tpu_custom_call.1} parent=1 // pred_region
      %67 = vst [vmem:[#allocation7] sm:$0xff] 0.0
      %68 = vst [vmem:[#allocation8] sm:$0xff] 0.0
    $region21: #{tpu_custom_call.1} parent=1 // pred_fallthru
      _
    %v69 = vld [vmem:[#allocation5] sm:$0xff]
    %v70 = vld [vmem:[#allocation5 + $0x8] sm:$0xff]
    %v71 = vld [vmem:[#allocation2] sm:$0xff]
    %v72 = vld [vmem:[#allocation2 + $0x8] sm:$0xff]
    %v73 = vsub.f32 %v69, %v71
    %v74 = vsub.f32 %v70, %v72
    %v75 = vld [vmem:[#allocation7] sm:$0xff]
    %v76 = vadd.f32 %v73, %v74
    %v77 = vadd.f32 %v75, %v76
    %78 = vst [vmem:[#allocation7] sm:$0xff] %v77
    %v79 = vld [vmem:[#allocation8] sm:$0xff]
    %v80 = vmin.f32 %v73, 0.0
    %v81 = vmin.f32 %v74, 0.0
    %v82 = vadd.f32 %v80, %v81
    %v83 = vadd.f32 %v79, %v82
    %84 = vst [vmem:[#allocation8] sm:$0xff] %v83
    // Predicated region
    $region22: #{tpu_custom_call.1} parent=1 // pred_check
      _
    $region23: #{tpu_custom_call.1} parent=1 // pred_check_branch
      %86 = sbr.rel (0) target = $region25
    $region24: #{tpu_custom_call.1} parent=1 // pred_region
      %s88 = ssub.s32 128, 128
      %89 = vsyncadd [#allocation4], %s88
      %s91 = sshll.u32 [#allocation7], 4
      %s92 = int_to_ptr.vmem [resolvable:$true] %s91
      %94 = dma.vmem_to_hbm [thread:$0]  %s92, 128, %s2, [#allocation4]
    $region25: #{tpu_custom_call.1} parent=1 // pred_fallthru
      _
    // Predicated region
    $region26: #{tpu_custom_call.1} parent=1 // pred_check
      _
    $region27: #{tpu_custom_call.1} parent=1 // pred_check_branch
      %96 = sbr.rel (0) target = $region29
    $region28: #{tpu_custom_call.1} parent=1 // pred_region
      %s98 = ssub.s32 128, 128
      %99 = vsyncadd [#allocation9], %s98
      %s101 = sshll.u32 [#allocation8], 4
      %s102 = int_to_ptr.vmem [resolvable:$true] %s101
      %104 = dma.vmem_to_hbm [thread:$0]  %s102, 128, %s3, [#allocation9]
    $region29: #{tpu_custom_call.1} parent=1 // pred_fallthru
      _
    // Predicated region
    $region30: #{tpu_custom_call.1} parent=1 // pred_check
      _
    $region31: #{tpu_custom_call.1} parent=1 // pred_check_branch
      %106 = sbr.rel (0) target = $region33
    $region32: #{tpu_custom_call.1} parent=1 // pred_region
      %107 = dma.done [#allocation4], 128
    $region33: #{tpu_custom_call.1} parent=1 // pred_fallthru
      _
    // Predicated region
    $region34: #{tpu_custom_call.1} parent=1 // pred_check
      _
    $region35: #{tpu_custom_call.1} parent=1 // pred_check_branch
      %109 = sbr.rel (0) target = $region37
    $region36: #{tpu_custom_call.1} parent=1 // pred_region
      %110 = dma.done [#allocation9], 128
    $region37: #{tpu_custom_call.1} parent=1 // pred_fallthru
      _
    %111 = vsyncpa [#allocation3], 1
    %112 = vsyncpa [#allocation6], 1
    %113 = vsyncpa [#allocation4], 1
    %114 = vsyncpa [#allocation9], 1

</llo_original>
